<compile_context>
chip_gen: v5e
topology: v5e:2x2
jax: 0.10.0
libtpu: 0.0.40
codegen_flags: <defaults>
</compile_context>

<pallas_src>
import jax
import jax.numpy as jnp
from jax.experimental import pallas as pl
from jax.experimental.pallas import tpu as pltpu


def _mql_kernel(x_ref, m_ref, wqt_ref, bq_ref, wkt_ref, bk_ref, wvt_ref, bv_ref, o_ref):
    B, Sx, E = o_ref.shape
    Sm = m_ref.shape[0] // B

    # Projections: batch folded into the MXU M dim, bf16 operands, f32 accumulation.
    # Weights arrive pre-transposed ([in, out]) -> plain x @ W, no in-kernel transpose.
    q = jnp.dot(x_ref[...], wqt_ref[...], preferred_element_type=jnp.float32) + bq_ref[...]
    k = jnp.dot(m_ref[...], wkt_ref[...], preferred_element_type=jnp.float32) + bk_ref[...]
    v = jnp.dot(m_ref[...], wvt_ref[...], preferred_element_type=jnp.float32) + bv_ref[...]

    # Un-fold the batch for the per-batch attention (splitting the leading dim at
    # sublane-tile multiples; layout-preserving).
    qb = q.reshape(B, Sx, E)
    kb = k.reshape(B, Sm, E)
    vb = v.reshape(B, Sm, E)

    # scores = q @ k^T per batch: contract the last dims, no materialized transpose.
    # TODO(synk): confirm via pl.lower_as_mlir that Mosaic does not insert a vxpose
    #             for the RHS contraction here (perf-only concern, semantics OK).
    s = jnp.einsum('bqd,bkd->bqk', qb, kb, preferred_element_type=jnp.float32)

    # Numerically-stable softmax in f32 (matches F.softmax(attn.float(), -1)).
    s = s - jnp.max(s, axis=-1, keepdims=True)
    p = jnp.exp(s)
    # EUP approximate reciprocal (free VLIW slot): rows sum to 1 within ~1e-3.
    p = p * pl.reciprocal(jnp.sum(p, axis=-1, keepdims=True), approx=True)

    # TODO(synk): F.dropout(p, attn_dropout, training=True) not implemented
    #             (inference path -> identity; training path would use pltpu.prng_random_bits).
    # TODO(synk): FilterMemory is undefined in the source module; treated as identity.

    out = jnp.einsum('bqk,bkd->bqd',
                     p.astype(jnp.bfloat16), vb.astype(jnp.bfloat16),
                     preferred_element_type=jnp.float32)
    o_ref[...] = out.astype(o_ref.dtype)


@jax.jit
def memory_query_layer(x, memory, wq, bq, wk, bk, wv, bv):
    """MemeoryQueryLayer forward.

    x:      [Sx, E] or [B, Sx, E]
    memory: [Sm, E] or [B, Sm, E]
    wq/wk/wv: [E, E] in PyTorch nn.Linear layout (y = x @ W.T + b); biases [E].
    Returns same leading layout as x, feature dim E, dtype of x.
    """
    squeeze = (x.ndim == 2)
    if squeeze:
        x = x[None]
        memory = memory[None]
    B, Sx, E = x.shape
    _, Sm, _ = memory.shape
    out_dtype = x.dtype

    cdt = jnp.bfloat16
    # One-time layout / dtype prep in the wrapper (kept out of the kernel):
    #   * weights pre-transposed to [in, out] (no in-kernel transpose),
    #   * matmul operands cast to bf16 (MXU native; halves input DMA bytes),
    #   * batch folded into the projection M dim (free HBM reshape).
    x2 = x.reshape(B * Sx, E).astype(cdt)
    m2 = memory.reshape(B * Sm, E).astype(cdt)
    wq_t = wq.T.astype(cdt)
    wk_t = wk.T.astype(cdt)
    wv_t = wv.T.astype(cdt)
    bq2 = bq.reshape(1, E).astype(jnp.float32)
    bk2 = bk.reshape(1, E).astype(jnp.float32)
    bv2 = bv.reshape(1, E).astype(jnp.float32)

    cost = pl.CostEstimate(
        flops=2 * B * E * E * (Sx + 2 * Sm) + 2 * 2 * B * Sx * Sm * E,
        transcendentals=B * Sx * Sm,
        bytes_accessed=(B * (Sx + Sm) * E + 3 * E * E) * 2   # bf16 activations + weights
                       + 3 * E * 4                            # f32 biases
                       + B * Sx * E * 4,                      # f32 output
    )

    # Single fat grid step: the whole problem is tiny and fully VMEM-resident.
    # TODO(synk): for large Sx/Sm/E this single-block design needs an Sx ("parallel")
    #             grid axis plus a flash-style Sm ("arbitrary") axis with online-softmax
    #             scratch and vmem_limit_bytes, and single-buffered weight specs.
    out = pl.pallas_call(
        _mql_kernel,
        out_shape=jax.ShapeDtypeStruct((B, Sx, E), out_dtype),
        grid_spec=pl.GridSpec(
            grid=(1,),
            in_specs=[
                pl.BlockSpec((B * Sx, E), lambda i: (0, 0)),   # x (batch folded)
                pl.BlockSpec((B * Sm, E), lambda i: (0, 0)),   # memory (batch folded)
                pl.BlockSpec((E, E), lambda i: (0, 0)),        # W_q^T
                pl.BlockSpec((1, E), lambda i: (0, 0)),        # b_q
                pl.BlockSpec((E, E), lambda i: (0, 0)),        # W_k^T
                pl.BlockSpec((1, E), lambda i: (0, 0)),        # b_k
                pl.BlockSpec((E, E), lambda i: (0, 0)),        # W_v^T
                pl.BlockSpec((1, E), lambda i: (0, 0)),        # b_v
            ],
            out_specs=pl.BlockSpec((B, Sx, E), lambda i: (0, 0, 0)),
        ),
        compiler_params=pltpu.CompilerParams(
            dimension_semantics=("arbitrary",)),
        cost_estimate=cost,
    )(x2, m2, wq_t, bq2, wk_t, bk2, wv_t, bv2)

    return out[0] if squeeze else out


def _reference(x, memory, wq, bq, wk, bk, wv, bv):
    q = x @ wq.T + bq
    k = memory @ wk.T + bk
    v = memory @ wv.T + bv
    s = jnp.einsum('...qd,...kd->...qk', q, k)
    p = jax.nn.softmax(s.astype(jnp.float32), axis=-1)
    return jnp.einsum('...qk,...kd->...qd', p, v)


if __name__ == "__main__":
    # Small shapes consistent with the module: seq=8, memory seq=8, embedding=32.
    Sx, Sm, E, B = 8, 8, 32, 4
    key = jax.random.PRNGKey(0)
    kx, km, k1, k2, k3, k4, k5, k6 = jax.random.split(key, 8)

    xb = jax.random.normal(kx, (B, Sx, E), dtype=jnp.float32)
    memb = jax.random.normal(km, (B, Sm, E), dtype=jnp.float32)

    # Deterministic nn.Linear-like init: uniform(-1/sqrt(E), 1/sqrt(E)).
    bound = 1.0 / (E ** 0.5)
    wq = jax.random.uniform(k1, (E, E), jnp.float32, -bound, bound)
    bq = jax.random.uniform(k2, (E,), jnp.float32, -bound, bound)
    wk = jax.random.uniform(k3, (E, E), jnp.float32, -bound, bound)
    bk = jax.random.uniform(k4, (E,), jnp.float32, -bound, bound)
    wv = jax.random.uniform(k5, (E, E), jnp.float32, -bound, bound)
    bv = jax.random.uniform(k6, (E,), jnp.float32, -bound, bound)

    # Tolerance relaxed because matmul operands are bf16 (f32 accumulation) and the
    # softmax denominator uses the EUP approximate reciprocal; reference is pure f32.
    ATOL = RTOL = 5e-2

    # 1) Exact module signature: 2D x / memory.
    out2d = jax.block_until_ready(
        memory_query_layer(xb[0], memb[0], wq, bq, wk, bk, wv, bv))
    ref2d = _reference(xb[0], memb[0], wq, bq, wk, bk, wv, bv)
    assert out2d.shape == (Sx, E)
    assert jnp.allclose(out2d, ref2d, atol=ATOL, rtol=RTOL), "2D mismatch vs reference"

    # 2) Batched variant: one pallas_call, one fat grid step, whole batch in VMEM.
    outb = jax.block_until_ready(
        memory_query_layer(xb, memb, wq, bq, wk, bk, wv, bv))
    refb = _reference(xb, memb, wq, bq, wk, bk, wv, bv)
    assert outb.shape == (B, Sx, E)
    assert jnp.allclose(outb, refb, atol=ATOL, rtol=RTOL), "batched mismatch vs reference"

    print("KERNEL_OK")
</pallas_src>

<mosaic_0001>
module attributes {stable_mosaic.version = 11 : i64} {
  func.func @_mql_kernel(%arg0: i32, %arg1: memref<8x32xbf16, #tpu.memory_space<vmem>>, %arg2: memref<8x32xbf16, #tpu.memory_space<vmem>>, %arg3: memref<32x32xbf16, #tpu.memory_space<vmem>>, %arg4: memref<1x32xf32, #tpu.memory_space<vmem>>, %arg5: memref<32x32xbf16, #tpu.memory_space<vmem>>, %arg6: memref<1x32xf32, #tpu.memory_space<vmem>>, %arg7: memref<32x32xbf16, #tpu.memory_space<vmem>>, %arg8: memref<1x32xf32, #tpu.memory_space<vmem>>, %arg9: memref<1x8x32xf32, #tpu.memory_space<vmem>>) attributes {dimension_semantics = [#tpu.dimension_semantics<arbitrary>], iteration_bounds = array<i64: 1>, scalar_prefetch = 0 : i64, scratch_operands = 0 : i64, tpu.core_type = #tpu.core_type<tc>, window_params = [{pipeline_mode = #tpu.pipeline_mode<synchronous>, transform_indices = @transform_0, window_bounds = array<i64: 8, 32>}, {pipeline_mode = #tpu.pipeline_mode<synchronous>, transform_indices = @transform_1, window_bounds = array<i64: 8, 32>}, {pipeline_mode = #tpu.pipeline_mode<synchronous>, transform_indices = @transform_2, window_bounds = array<i64: 32, 32>}, {pipeline_mode = #tpu.pipeline_mode<synchronous>, transform_indices = @transform_3, window_bounds = array<i64: 1, 32>}, {pipeline_mode = #tpu.pipeline_mode<synchronous>, transform_indices = @transform_4, window_bounds = array<i64: 32, 32>}, {pipeline_mode = #tpu.pipeline_mode<synchronous>, transform_indices = @transform_5, window_bounds = array<i64: 1, 32>}, {pipeline_mode = #tpu.pipeline_mode<synchronous>, transform_indices = @transform_6, window_bounds = array<i64: 32, 32>}, {pipeline_mode = #tpu.pipeline_mode<synchronous>, transform_indices = @transform_7, window_bounds = array<i64: 1, 32>}, {pipeline_mode = #tpu.pipeline_mode<synchronous>, transform_indices = @transform_8, window_bounds = array<i64: 1, 8, 32>}]} {
    %c0 = arith.constant 0 : index
    %c0_0 = arith.constant 0 : index
    %0 = vector.load %arg1[%c0, %c0_0] : memref<8x32xbf16, #tpu.memory_space<vmem>>, vector<8x32xbf16>
    %c0_1 = arith.constant 0 : index
    %c0_2 = arith.constant 0 : index
    %1 = vector.load %arg3[%c0_1, %c0_2] : memref<32x32xbf16, #tpu.memory_space<vmem>>, vector<32x32xbf16>
    %cst = arith.constant dense<0.000000e+00> : vector<8x32xf32>
    %2 = tpu.matmul %0, %1, %cst {dimension_numbers = #tpu.dot_dimension_numbers<[1], [0], [0], [1], [0, 0, 1, 1], [], []>} : vector<8x32xbf16>, vector<32x32xbf16>, vector<8x32xf32> -> vector<8x32xf32>
    %c0_3 = arith.constant 0 : index
    %c0_4 = arith.constant 0 : index
    %3 = vector.load %arg4[%c0_3, %c0_4] : memref<1x32xf32, #tpu.memory_space<vmem>>, vector<1x32xf32>
    %4 = vector.broadcast %3 : vector<1x32xf32> to vector<8x32xf32>
    %5 = arith.addf %2, %4 : vector<8x32xf32>
    %c0_5 = arith.constant 0 : index
    %c0_6 = arith.constant 0 : index
    %6 = vector.load %arg2[%c0_5, %c0_6] : memref<8x32xbf16, #tpu.memory_space<vmem>>, vector<8x32xbf16>
    %c0_7 = arith.constant 0 : index
    %c0_8 = arith.constant 0 : index
    %7 = vector.load %arg5[%c0_7, %c0_8] : memref<32x32xbf16, #tpu.memory_space<vmem>>, vector<32x32xbf16>
    %cst_9 = arith.constant dense<0.000000e+00> : vector<8x32xf32>
    %8 = tpu.matmul %6, %7, %cst_9 {dimension_numbers = #tpu.dot_dimension_numbers<[1], [0], [0], [1], [0, 0, 1, 1], [], []>} : vector<8x32xbf16>, vector<32x32xbf16>, vector<8x32xf32> -> vector<8x32xf32>
    %c0_10 = arith.constant 0 : index
    %c0_11 = arith.constant 0 : index
    %9 = vector.load %arg6[%c0_10, %c0_11] : memref<1x32xf32, #tpu.memory_space<vmem>>, vector<1x32xf32>
    %10 = vector.broadcast %9 : vector<1x32xf32> to vector<8x32xf32>
    %11 = arith.addf %8, %10 : vector<8x32xf32>
    %c0_12 = arith.constant 0 : index
    %c0_13 = arith.constant 0 : index
    %12 = vector.load %arg2[%c0_12, %c0_13] : memref<8x32xbf16, #tpu.memory_space<vmem>>, vector<8x32xbf16>
    %c0_14 = arith.constant 0 : index
    %c0_15 = arith.constant 0 : index
    %13 = vector.load %arg7[%c0_14, %c0_15] : memref<32x32xbf16, #tpu.memory_space<vmem>>, vector<32x32xbf16>
    %cst_16 = arith.constant dense<0.000000e+00> : vector<8x32xf32>
    %14 = tpu.matmul %12, %13, %cst_16 {dimension_numbers = #tpu.dot_dimension_numbers<[1], [0], [0], [1], [0, 0, 1, 1], [], []>} : vector<8x32xbf16>, vector<32x32xbf16>, vector<8x32xf32> -> vector<8x32xf32>
    %c0_17 = arith.constant 0 : index
    %c0_18 = arith.constant 0 : index
    %15 = vector.load %arg8[%c0_17, %c0_18] : memref<1x32xf32, #tpu.memory_space<vmem>>, vector<1x32xf32>
    %16 = vector.broadcast %15 : vector<1x32xf32> to vector<8x32xf32>
    %17 = arith.addf %14, %16 : vector<8x32xf32>
    %18 = vector.shape_cast %5 : vector<8x32xf32> to vector<1x8x32xf32>
    %19 = vector.shape_cast %11 : vector<8x32xf32> to vector<1x8x32xf32>
    %20 = vector.shape_cast %17 : vector<8x32xf32> to vector<1x8x32xf32>
    "tpu.trace_start"() <{level = 10 : i32, message = "bqd,bkd->bqk"}> : () -> ()
    %cst_19 = arith.constant dense<0.000000e+00> : vector<1x8x8xf32>
    %21 = tpu.matmul %18, %19, %cst_19 {dimension_numbers = #tpu.dot_dimension_numbers<[2], [2], [1], [1], [0, 0, 0, 1, 1, 1], [0], [0]>} : vector<1x8x32xf32>, vector<1x8x32xf32>, vector<1x8x8xf32> -> vector<1x8x8xf32>
    "tpu.trace_stop"() : () -> ()
    %cst_20 = arith.constant dense<0xFF800000> : vector<1x8xf32>
    %22 = vector.multi_reduction <maximumf>, %21, %cst_20 [2] : vector<1x8x8xf32> to vector<1x8xf32>
    %23 = vector.shape_cast %22 : vector<1x8xf32> to vector<1x8x1xf32>
    %24 = vector.broadcast %23 : vector<1x8x1xf32> to vector<1x8x8xf32>
    %25 = arith.subf %21, %24 : vector<1x8x8xf32>
    %26 = math.exp %25 : vector<1x8x8xf32>
    %cst_21 = arith.constant dense<0.000000e+00> : vector<1x8xf32>
    %27 = vector.multi_reduction <add>, %26, %cst_21 [2] : vector<1x8x8xf32> to vector<1x8xf32>
    %28 = vector.shape_cast %27 : vector<1x8xf32> to vector<1x8x1xf32>
    %29 = tpu.reciprocal %28 {approx = true} : vector<1x8x1xf32> -> vector<1x8x1xf32>
    %30 = vector.broadcast %29 : vector<1x8x1xf32> to vector<1x8x8xf32>
    %31 = arith.mulf %26, %30 : vector<1x8x8xf32>
    %32 = arith.truncf %31 : vector<1x8x8xf32> to vector<1x8x8xbf16>
    %33 = arith.truncf %20 : vector<1x8x32xf32> to vector<1x8x32xbf16>
    "tpu.trace_start"() <{level = 10 : i32, message = "bqk,bkd->bqd"}> : () -> ()
    %cst_22 = arith.constant dense<0.000000e+00> : vector<1x8x32xf32>
    %34 = tpu.matmul %32, %33, %cst_22 {dimension_numbers = #tpu.dot_dimension_numbers<[2], [1], [1], [2], [0, 0, 0, 1, 1, 2], [0], [0]>} : vector<1x8x8xbf16>, vector<1x8x32xbf16>, vector<1x8x32xf32> -> vector<1x8x32xf32>
    "tpu.trace_stop"() : () -> ()
    %c0_23 = arith.constant 0 : index
    %c0_24 = arith.constant 0 : index
    %c0_25 = arith.constant 0 : index
    %35 = vector.load %arg9[%c0_23, %c0_24, %c0_25] : memref<1x8x32xf32, #tpu.memory_space<vmem>>, vector<1x8x32xf32>
    tpu.vector_store %arg9[%c0_23, %c0_24, %c0_25], %34 {strides = array<i32>} : memref<1x8x32xf32, #tpu.memory_space<vmem>>, vector<1x8x32xf32>,
    return
  }
  func.func @transform_0(%arg0: i32) -> (i32, i32) {
    %c0_i32 = arith.constant 0 : i32
    %c0_i32_0 = arith.constant 0 : i32
    %c0_i32_1 = arith.constant 0 : i32
    return %c0_i32, %c0_i32_0 : i32, i32
  }
  func.func @transform_1(%arg0: i32) -> (i32, i32) {
    %c0_i32 = arith.constant 0 : i32
    %c0_i32_0 = arith.constant 0 : i32
    %c0_i32_1 = arith.constant 0 : i32
    return %c0_i32, %c0_i32_0 : i32, i32
  }
  func.func @transform_2(%arg0: i32) -> (i32, i32) {
    %c0_i32 = arith.constant 0 : i32
    %c0_i32_0 = arith.constant 0 : i32
    %c0_i32_1 = arith.constant 0 : i32
    return %c0_i32, %c0_i32_0 : i32, i32
  }
  func.func @transform_3(%arg0: i32) -> (i32, i32) {
    %c0_i32 = arith.constant 0 : i32
    %c0_i32_0 = arith.constant 0 : i32
    %c0_i32_1 = arith.constant 0 : i32
    return %c0_i32, %c0_i32_0 : i32, i32
  }
  func.func @transform_4(%arg0: i32) -> (i32, i32) {
    %c0_i32 = arith.constant 0 : i32
    %c0_i32_0 = arith.constant 0 : i32
    %c0_i32_1 = arith.constant 0 : i32
    return %c0_i32, %c0_i32_0 : i32, i32
  }
  func.func @transform_5(%arg0: i32) -> (i32, i32) {
    %c0_i32 = arith.constant 0 : i32
    %c0_i32_0 = arith.constant 0 : i32
    %c0_i32_1 = arith.constant 0 : i32
    return %c0_i32, %c0_i32_0 : i32, i32
  }
  func.func @transform_6(%arg0: i32) -> (i32, i32) {
    %c0_i32 = arith.constant 0 : i32
    %c0_i32_0 = arith.constant 0 : i32
    %c0_i32_1 = arith.constant 0 : i32
    return %c0_i32, %c0_i32_0 : i32, i32
  }
  func.func @transform_7(%arg0: i32) -> (i32, i32) {
    %c0_i32 = arith.constant 0 : i32
    %c0_i32_0 = arith.constant 0 : i32
    %c0_i32_1 = arith.constant 0 : i32
    return %c0_i32, %c0_i32_0 : i32, i32
  }
  func.func @transform_8(%arg0: i32) -> (i32, i32, i32) {
    %c0_i32 = arith.constant 0 : i32
    %c0_i32_0 = arith.constant 0 : i32
    %c0_i32_1 = arith.constant 0 : i32
    %c0_i32_2 = arith.constant 0 : i32
    return %c0_i32, %c0_i32_0, %c0_i32_1 : i32, i32, i32
  }
}

</mosaic_0001>

<llo_original>
// kernel: memory_query_layer.1
$region0: #{memory_query_layer.1}
  #allocation0 [shape = 'u32[]', space=smem, size = 0x4, offset = 0x4, fixed_abs, tag = 'smem constant byte address 0x4 - core index']
  #allocation1 [shape = 'u32[72,128]{1,0:T(1,128)}', space=vmem, size = 0x9000, scoped, tag = 'internal scratch']
  %s0 = inlined_call_operand.vmem [shape: bf16[8,32], index: 0, kind: input, shape index: {}]
  %s1 = inlined_call_operand.vmem [shape: bf16[8,32], index: 1, kind: input, shape index: {}]
  %s2 = inlined_call_operand.vmem [shape: bf16[32,32], index: 2, kind: input, shape index: {}]
  %s3 = inlined_call_operand.vmem [shape: f32[1,32], index: 3, kind: input, shape index: {}]
  %s4 = inlined_call_operand.vmem [shape: bf16[32,32], index: 4, kind: input, shape index: {}]
  %s5 = inlined_call_operand.vmem [shape: f32[1,32], index: 5, kind: input, shape index: {}]
  %s6 = inlined_call_operand.vmem [shape: bf16[32,32], index: 6, kind: input, shape index: {}]
  %s7 = inlined_call_operand.vmem [shape: f32[1,32], index: 7, kind: input, shape index: {}]
  %s8 = inlined_call_operand.hbm [shape: f32[1,8,32], index: 8, kind: output, shape index: {}]
  %s9 = sld [smem:[#allocation0]]
  $region42: #{memory_query_layer.1} parent=0
    _
  %s11 = ssub.s32 1, %s9
  %s12 = scalar_select 0, %s11, %s9
  $region1: #{memory_query_layer.1} parent=0
    #allocation2 [shape = 'u8[4096]{0}', space=vmem, size = 0x1000, scoped, tag = 'output window, operand 0, single buffered']
    #allocation3 [shape = 's32[1]{0}', space=sflag, size = 0x4, scoped, tag = 'scoped memory for memory_query_layer.1']
    %13 = vsyncpa [#allocation3], 0
    // Predicated region
    $region2: #{memory_query_layer.1} parent=1 // pred_check
      _
    $region3: #{memory_query_layer.1} parent=1 // pred_check_branch
      %15 = sbr.rel (0) target = $region5
    $region4: #{memory_query_layer.1} parent=1 // pred_region
      _
    $region5: #{memory_query_layer.1} parent=1 // pred_fallthru
      _
    // Predicated region
    $region6: #{memory_query_layer.1} parent=1 // pred_check
      _
    $region7: #{memory_query_layer.1} parent=1 // pred_check_branch
      %17 = sbr.rel (0) target = $region9
    $region8: #{memory_query_layer.1} parent=1 // pred_region
      _
    $region9: #{memory_query_layer.1} parent=1 // pred_fallthru
      _
    // Predicated region
    $region10: #{memory_query_layer.1} parent=1 // pred_check
      _
    $region11: #{memory_query_layer.1} parent=1 // pred_check_branch
      %19 = sbr.rel (0) target = $region13
    $region12: #{memory_query_layer.1} parent=1 // pred_region
      _
    $region13: #{memory_query_layer.1} parent=1 // pred_fallthru
      _
    // Predicated region
    $region14: #{memory_query_layer.1} parent=1 // pred_check
      _
    $region15: #{memory_query_layer.1} parent=1 // pred_check_branch
      %21 = sbr.rel (0) target = $region17
    $region16: #{memory_query_layer.1} parent=1 // pred_region
      _
    $region17: #{memory_query_layer.1} parent=1 // pred_fallthru
      _
    // Predicated region
    $region18: #{memory_query_layer.1} parent=1 // pred_check
      _
    $region19: #{memory_query_layer.1} parent=1 // pred_check_branch
      %23 = sbr.rel (0) target = $region21
    $region20: #{memory_query_layer.1} parent=1 // pred_region
      _
    $region21: #{memory_query_layer.1} parent=1 // pred_fallthru
      _
    // Predicated region
    $region22: #{memory_query_layer.1} parent=1 // pred_check
      _
    $region23: #{memory_query_layer.1} parent=1 // pred_check_branch
      %25 = sbr.rel (0) target = $region25
    $region24: #{memory_query_layer.1} parent=1 // pred_region
      _
    $region25: #{memory_query_layer.1} parent=1 // pred_fallthru
      _
    // Predicated region
    $region26: #{memory_query_layer.1} parent=1 // pred_check
      _
    $region27: #{memory_query_layer.1} parent=1 // pred_check_branch
      %27 = sbr.rel (0) target = $region29
    $region28: #{memory_query_layer.1} parent=1 // pred_region
      _
    $region29: #{memory_query_layer.1} parent=1 // pred_fallthru
      _
    // Predicated region
    $region30: #{memory_query_layer.1} parent=1 // pred_check
      _
    $region31: #{memory_query_layer.1} parent=1 // pred_check_branch
      %29 = sbr.rel (0) target = $region33
    $region32: #{memory_query_layer.1} parent=1 // pred_region
      _
    $region33: #{memory_query_layer.1} parent=1 // pred_fallthru
      _
    %v31 = vld [vmem:[%s0] sm:$0xf]
    %v32 = vld [vmem:[%s2] sm:$0xf]
    %v33 = vld [vmem:[%s2 + $0x4] sm:$0xf]
    %v34 = vld [vmem:[%s2 + $0x8] sm:$0xf]
    %v35 = vld [vmem:[%s2 + $0xc] sm:$0xf]
    %v36 = vld [vmem:[%s3] sm:$0x1]
    %v38 = vperm.slane %v36, 0
    %v44 = vunpack.c.l.b16 %v32
    %v45 = vunpack.c.l.b16 %v33
    %v46 = vunpack.c.l.b16 %v34
    %v47 = vunpack.c.l.b16 %v35
    %v48 = vpack.c.b16 %v45, %v44
    %v49 = vpack.c.b16 %v47, %v46
    %vm52 = vcmask 261120
    %v54 = vsel %vm52, %v31, 0
    %56 = vmatpush.bf16.msra.mxu0 0
    %57 = vmatpush.bf16.msra.mxu0 0
    %58 = vmatpush.bf16.msra.mxu0 0
    %59 = vmatpush.bf16.msra.mxu0 0
    %60 = vmatpush.bf16.msra.mxu0 0
    %61 = vmatpush.bf16.msra.mxu0 0
    %62 = vmatpush.bf16.msra.mxu0 %v49
    %63 = vmatpush.bf16.msra.mxu0 %v48
    %64 = vmatmul.bf16.gmra.mxu0 %v54
    %v65 = vpop.f32.mrf.mxu0
    %v66 = vadd.f32 %v38, %v65
    %v67 = vpop.f32.mrf.mxu0
    %68 = vdwg.mxu0
    %v69 = vld [vmem:[%s1] sm:$0xf]
    %v70 = vld [vmem:[%s4] sm:$0xf]
    %v71 = vld [vmem:[%s4 + $0x4] sm:$0xf]
    %v72 = vld [vmem:[%s4 + $0x8] sm:$0xf]
    %v73 = vld [vmem:[%s4 + $0xc] sm:$0xf]
    %v74 = vld [vmem:[%s5] sm:$0x1]
    %v76 = vperm.slane %v74, 0
    %v82 = vunpack.c.l.b16 %v70
    %v83 = vunpack.c.l.b16 %v71
    %v84 = vunpack.c.l.b16 %v72
    %v85 = vunpack.c.l.b16 %v73
    %v86 = vpack.c.b16 %v83, %v82
    %v87 = vpack.c.b16 %v85, %v84
    %v91 = vsel %vm52, %v69, 0
    %93 = vmatpush.bf16.msra.mxu0 0
    %94 = vmatpush.bf16.msra.mxu0 0
    %95 = vmatpush.bf16.msra.mxu0 0
    %96 = vmatpush.bf16.msra.mxu0 0
    %97 = vmatpush.bf16.msra.mxu0 0
    %98 = vmatpush.bf16.msra.mxu0 0
    %99 = vmatpush.bf16.msra.mxu0 %v87
    %100 = vmatpush.bf16.msra.mxu0 %v86
    %101 = vmatmul.bf16.gmra.mxu0 %v91
    %v102 = vpop.f32.mrf.mxu0
    %v103 = vadd.f32 %v76, %v102
    %v104 = vpop.f32.mrf.mxu0
    %105 = vdwg.mxu0
    %v106 = vld [vmem:[%s6] sm:$0xf]
    %v107 = vld [vmem:[%s6 + $0x4] sm:$0xf]
    %v108 = vld [vmem:[%s6 + $0x8] sm:$0xf]
    %v109 = vld [vmem:[%s6 + $0xc] sm:$0xf]
    %v110 = vld [vmem:[%s7] sm:$0x1]
    %v112 = vperm.slane %v110, 0
    %v118 = vunpack.c.l.b16 %v106
    %v119 = vunpack.c.l.b16 %v107
    %v120 = vunpack.c.l.b16 %v108
    %v121 = vunpack.c.l.b16 %v109
    %v122 = vpack.c.b16 %v119, %v118
    %v123 = vpack.c.b16 %v121, %v120
    %126 = vmatpush.bf16.msra.mxu0 0
    %127 = vmatpush.bf16.msra.mxu0 0
    %128 = vmatpush.bf16.msra.mxu0 0
    %129 = vmatpush.bf16.msra.mxu0 0
    %130 = vmatpush.bf16.msra.mxu0 0
    %131 = vmatpush.bf16.msra.mxu0 0
    %132 = vmatpush.bf16.msra.mxu0 %v123
    %133 = vmatpush.bf16.msra.mxu0 %v122
    %134 = vmatmul.bf16.gmra.mxu0 %v91
    %v135 = vpop.f32.mrf.mxu0
    %v136 = vadd.f32 %v112, %v135
    %v137 = vpop.f32.mrf.mxu0
    %138 = vdwg.mxu0
    %v140 = vsel %vm52, %v66, 0
    %v143 = vsel %vm52, %v103, 0
    %145 = vmatpush.xpose.msra.mxu0 0.0
    %146 = vmatpush.xpose.msra.mxu0 0.0
    %147 = vmatpush.xpose.msra.mxu0 0.0
    %148 = vmatpush.xpose.msra.mxu0 0.0
    %149 = vmatpush.xpose.msra.mxu0 0.0
    %150 = vmatpush.xpose.msra.mxu0 0.0
    %151 = vmatpush.xpose.msra.mxu0 0.0
    %152 = vmatpush.xpose.msra.mxu0 0.0
    %153 = vmatpush.xpose.msra.mxu0 0.0
    %154 = vmatpush.xpose.msra.mxu0 0.0
    %155 = vmatpush.xpose.msra.mxu0 0.0
    %156 = vmatpush.xpose.msra.mxu0 0.0
    %157 = vmatpush.xpose.msra.mxu0 0.0
    %158 = vmatpush.xpose.msra.mxu0 0.0
    %159 = vmatpush.xpose.msra.mxu0 0.0
    %160 = vmatpush.xpose.msra.mxu0 %v143
    %161 = vmatmul.f32.gmra.mxu0 %v140
    %v162 = vpop.f32.mrf.mxu0
    %v163 = vadd.f32 0.0, %v162
    %164 = vdwg.mxu0
    %vm165 = vcmask 64512
    %v166 = vsel %vm165, %v163, -inf
    %167 = vmax.xlane.f32.xlu0 %v166
    %v168 = vpop.xlane.xlu0 %167
    %v169 = vsub.f32 %v163, %v168
    %v170 = vmul.f32 %v169, 1.442695
    %v171 = vpow.pop %v170
    %v172 = vsel %vm165, %v171, 0.0
    %173 = vadd.xlane.f32.xlu0 %v172
    %v174 = vpop.xlane.xlu0 %173
    %v175 = vrcp.pop %v174
    %v176 = vmul.f32 %v171, %v175
    %v177 = vpack.c.bf16 %v176, %v176
    %v178 = vpack.c.bf16 %v136, %v136
    %v180 = vsel %vm165, %v177, 0
    %vm182 = vcmask 1043456
    %v184 = vsel %vm182, %v178, 0
    %186 = vmatpush.bf16.msra.mxu0 0
    %187 = vmatpush.bf16.msra.mxu0 0
    %188 = vmatpush.bf16.msra.mxu0 0
    %189 = vmatpush.bf16.msra.mxu0 0
    %190 = vmatpush.bf16.msra.mxu0 0
    %191 = vmatpush.bf16.msra.mxu0 0
    %192 = vmatpush.bf16.msra.mxu0 0
    %193 = vmatpush.bf16.msra.mxu0 %v184
    %194 = vmatmul.bf16.gmra.mxu0 %v180
    %v195 = vpop.f32.mrf.mxu0
    %v196 = vadd.f32 0.0, %v195
    %v197 = vpop.f32.mrf.mxu0
    %198 = vdwg.mxu0
    %199 = vst.msk [vmem:[#allocation2] sm:$0xff] %vm52, %v196
    // Predicated region
    $region34: #{memory_query_layer.1} parent=1 // pred_check
      _
    $region35: #{memory_query_layer.1} parent=1 // pred_check_branch
      %201 = sbr.rel (0) target = $region37
    $region36: #{memory_query_layer.1} parent=1 // pred_region
      %203 = vsyncadd [#allocation3], 0
      %s205 = sshll.u32 [#allocation2], 4
      %s206 = int_to_ptr.vmem [resolvable:$true] %s205
      %s207 = sshll.u32 %s8, 4
      %s208 = int_to_ptr.hbm [resolvable:$true] %s207
      %210 = dma.vmem_to_hbm [thread:$0]  %s206, 128, %s208, [#allocation3]
    $region37: #{memory_query_layer.1} parent=1 // pred_fallthru
      _
    // Predicated region
    $region38: #{memory_query_layer.1} parent=1 // pred_check
      _
    $region39: #{memory_query_layer.1} parent=1 // pred_check_branch
      %212 = sbr.rel (0) target = $region41
    $region40: #{memory_query_layer.1} parent=1 // pred_region
      %214 = dma.done [#allocation3], 128
    $region41: #{memory_query_layer.1} parent=1 // pred_fallthru
      _
    %215 = vsyncpa [#allocation3], 1

</llo_original>
